<compile_context>
chip_gen: v6e
topology: v6e:2x2x1
jax: 0.10.0
libtpu: 0.0.40
codegen_flags: <defaults>
</compile_context>

<pallas_src>
import jax
import jax.numpy as jnp
from jax.experimental import pallas as pl
from jax.experimental.pallas import tpu as pltpu


def _round_up(x, m):
    return (x + m - 1) // m * m


def envelope_kernel(p_ref, c_ref, out_ref):
    # p_ref  : (TB, N)  batch parameters; batch on sublanes, variables on lanes
    # c_ref  : (4, N)   packed resident constants: [1/q, 0.5*q, lb, ub]
    # out_ref: (TB, 1)  optimal value per batch row
    p = p_ref[...].astype(jnp.float32)        # bf16-in-HBM supported; f32 compute
    inv_q = c_ref[0:1, :]                     # (1, N) — sublane-broadcast, ~free
    half_q = c_ref[1:2, :]
    lb = c_ref[2:3, :]
    ub = c_ref[3:4, :]

    # Closed-form solve of the box-constrained diagonal QP (per batch row).
    z = jnp.minimum(jnp.maximum(p * inv_q, lb), ub)   # project p/q onto [lb, ub]

    # Optimal objective 0.5*q*z^2 - p*z, factored to save one VPU multiply.
    obj = z * (half_q * z - p)                        # (TB, N)

    # Reduce over the variable axis (lanes, XLU) -> (TB, 1) output.
    out_ref[...] = jnp.sum(obj, axis=-1, keepdims=True)


def envelope_forward(p, q, lb, ub, *, tb=8192, min_tiles=8):
    """p: (B, N) batch params; q, lb, ub: (N,) fixed problem data. Returns (B,)."""
    B, N = p.shape

    # Sublane alignment: 8 for f32, 16 for bf16 (packed sublanes).
    align = 16 if p.dtype == jnp.bfloat16 else 8
    # Cap the tile so the grid keeps >= min_tiles steps (v7x megacore),
    # but never below one aligned row group; never above the desired tb
    # (tb=8192 f32 -> 4 MiB tile, ~8 MiB double-buffered: fits every
    # generation's scoped-VMEM default, including v5e's 16 MiB).
    tb_cap = max(align, _round_up(pl.cdiv(B, min_tiles), align))
    TB = min(_round_up(tb, align), tb_cap)

    qf = q.astype(jnp.float32)
    consts = jnp.stack(                              # (4, N) resident, ~2 KiB
        [1.0 / qf, 0.5 * qf, lb.astype(jnp.float32), ub.astype(jnp.float32)],
        axis=0)

    cost = pl.CostEstimate(
        flops=7 * B * N,
        transcendentals=0,
        bytes_accessed=B * N * p.dtype.itemsize + B * 4 + 4 * N * 4)

    out = pl.pallas_call(
        envelope_kernel,
        out_shape=jax.ShapeDtypeStruct((B, 1), jnp.float32),
        grid_spec=pl.GridSpec(
            grid=(pl.cdiv(B, TB),),
            in_specs=[
                pl.BlockSpec((TB, N), lambda i: (i, 0)),  # streamed, pipelined
                pl.BlockSpec((4, N), lambda i: (0, 0)),   # resident constants
            ],
            out_specs=pl.BlockSpec((TB, 1), lambda i: (i, 0)),
        ),
        compiler_params=pltpu.CompilerParams(
            dimension_semantics=("parallel",)),           # batch tiles independent
        cost_estimate=cost,
    )(p, consts)
    return out[:, 0]


def envelope_forward_ref(p, q, lb, ub):
    """Pure-JAX reference of the same convex program's optimal values."""
    pf = p.astype(jnp.float32)
    z = jnp.clip(pf / q[None, :], lb[None, :], ub[None, :])
    return jnp.sum(0.5 * q[None, :] * z * z - pf * z, axis=-1)


if __name__ == "__main__":
    key = jax.random.PRNGKey(0)
    B, N = 8, 128  # batch of convex programs, variable dimension

    kp, kq = jax.random.split(key)
    p = jax.random.normal(kp, (B, N), dtype=jnp.float32)          # batch params
    q = 1.0 + jax.random.uniform(kq, (N,), dtype=jnp.float32)     # diag(Q) > 0
    lb = -0.5 * jnp.ones((N,), dtype=jnp.float32)
    ub = 0.5 * jnp.ones((N,), dtype=jnp.float32)

    out = jax.block_until_ready(envelope_forward(p, q, lb, ub))
    ref = envelope_forward_ref(p, q, lb, ub)
    assert out.shape == (B,)
    assert jnp.allclose(out, ref, atol=1e-5, rtol=1e-5), (out, ref)

    # Exercise multi-tile pipelining + a ragged batch (partial last block,
    # no wrapper-side padding) + the bf16-in-HBM path (kernel casts to f32).
    B2 = 272
    p2 = jax.random.normal(jax.random.PRNGKey(1), (B2, N), dtype=jnp.float32)
    p2_bf16 = p2.astype(jnp.bfloat16)
    out2 = jax.block_until_ready(envelope_forward(p2_bf16, q, lb, ub))
    ref2 = envelope_forward_ref(p2_bf16, q, lb, ub)  # same bf16-quantized p
    assert out2.shape == (B2,)
    assert jnp.allclose(out2, ref2, atol=1e-4, rtol=1e-4), (out2, ref2)

    print("KERNEL_OK")
</pallas_src>

<mosaic_0001>
module attributes {stable_mosaic.version = 11 : i64} {
  func.func @envelope_kernel(%arg0: i32, %arg1: memref<8x128xf32, #tpu.memory_space<vmem>>, %arg2: memref<4x128xf32, #tpu.memory_space<vmem>>, %arg3: memref<8x1xf32, #tpu.memory_space<vmem>>) attributes {dimension_semantics = [#tpu.dimension_semantics<parallel>], iteration_bounds = array<i64: 1>, scalar_prefetch = 0 : i64, scratch_operands = 0 : i64, tpu.core_type = #tpu.core_type<tc>, window_params = [{transform_indices = @transform_0, window_bounds = array<i64: 8, 128>}, {pipeline_mode = #tpu.pipeline_mode<synchronous>, transform_indices = @transform_1, window_bounds = array<i64: 4, 128>}, {transform_indices = @transform_2, window_bounds = array<i64: 8, 1>}]} {
    %c0 = arith.constant 0 : index
    %c0_0 = arith.constant 0 : index
    %0 = vector.load %arg1[%c0, %c0_0] : memref<8x128xf32, #tpu.memory_space<vmem>>, vector<8x128xf32>
    %c0_1 = arith.constant 0 : index
    %c0_2 = arith.constant 0 : index
    %1 = vector.load %arg2[%c0_1, %c0_2] : memref<4x128xf32, #tpu.memory_space<vmem>>, vector<1x128xf32>
    %c1 = arith.constant 1 : index
    %c0_3 = arith.constant 0 : index
    %2 = vector.load %arg2[%c1, %c0_3] : memref<4x128xf32, #tpu.memory_space<vmem>>, vector<1x128xf32>
    %c2 = arith.constant 2 : index
    %c0_4 = arith.constant 0 : index
    %3 = vector.load %arg2[%c2, %c0_4] : memref<4x128xf32, #tpu.memory_space<vmem>>, vector<1x128xf32>
    %c3 = arith.constant 3 : index
    %c0_5 = arith.constant 0 : index
    %4 = vector.load %arg2[%c3, %c0_5] : memref<4x128xf32, #tpu.memory_space<vmem>>, vector<1x128xf32>
    %5 = vector.broadcast %1 : vector<1x128xf32> to vector<8x128xf32>
    %6 = arith.mulf %0, %5 : vector<8x128xf32>
    %7 = vector.broadcast %3 : vector<1x128xf32> to vector<8x128xf32>
    %8 = arith.maximumf %6, %7 : vector<8x128xf32>
    %9 = vector.broadcast %4 : vector<1x128xf32> to vector<8x128xf32>
    %10 = arith.minimumf %8, %9 : vector<8x128xf32>
    %11 = vector.broadcast %2 : vector<1x128xf32> to vector<8x128xf32>
    %12 = arith.mulf %11, %10 : vector<8x128xf32>
    %13 = arith.subf %12, %0 : vector<8x128xf32>
    %14 = arith.mulf %10, %13 : vector<8x128xf32>
    %cst = arith.constant dense<0.000000e+00> : vector<8xf32>
    %15 = vector.multi_reduction <add>, %14, %cst [1] : vector<8x128xf32> to vector<8xf32>
    %16 = vector.shape_cast %15 : vector<8xf32> to vector<8x1xf32>
    %c0_6 = arith.constant 0 : index
    %c0_7 = arith.constant 0 : index
    %17 = vector.load %arg3[%c0_6, %c0_7] : memref<8x1xf32, #tpu.memory_space<vmem>>, vector<8x1xf32>
    tpu.vector_store %arg3[%c0_6, %c0_7], %16 {strides = array<i32>} : memref<8x1xf32, #tpu.memory_space<vmem>>, vector<8x1xf32>,
    return
  }
  func.func @transform_0(%arg0: i32) -> (i32, i32) {
    %c0_i32 = arith.constant 0 : i32
    %c0_i32_0 = arith.constant 0 : i32
    return %arg0, %c0_i32 : i32, i32
  }
  func.func @transform_1(%arg0: i32) -> (i32, i32) {
    %c0_i32 = arith.constant 0 : i32
    %c0_i32_0 = arith.constant 0 : i32
    %c0_i32_1 = arith.constant 0 : i32
    return %c0_i32, %c0_i32_0 : i32, i32
  }
  func.func @transform_2(%arg0: i32) -> (i32, i32) {
    %c0_i32 = arith.constant 0 : i32
    %c0_i32_0 = arith.constant 0 : i32
    return %arg0, %c0_i32 : i32, i32
  }
}

</mosaic_0001>

<llo_original>
// kernel: tpu_custom_call.1
$region0: #{tpu_custom_call.1}
  #allocation0 [shape = 'u32[]', space=smem, size = 0x4, offset = 0x4, fixed_abs, tag = 'smem constant byte address 0x4 - core index']
  #allocation1 [shape = 'u32[144,128]{1,0:T(1,128)}', space=vmem, size = 0x12000, scoped, tag = 'internal scratch']
  %s0 = inlined_call_operand.hbm [shape: f32[8,128], index: 0, kind: input, shape index: {}]
  %s1 = inlined_call_operand.hbm [shape: f32[4,128], index: 1, kind: input, shape index: {}]
  %s2 = inlined_call_operand.vmem [shape: f32[8,1], index: 2, kind: output, shape index: {}]
  %s3 = sld [smem:[#allocation0]]
  $region26: #{tpu_custom_call.1} parent=0
    _
  %s5 = ssub.s32 1, %s3
  %s6 = scalar_select 0, %s5, %s3
  $region1: #{tpu_custom_call.1} parent=0
    #allocation2 [shape = 'u8[4096]{0}', space=vmem, size = 0x1000, scoped, tag = 'input window, operand 0, single buffered']
    #allocation3 [shape = 's32[1]{0}', space=sflag, size = 0x4, scoped, tag = 'scoped memory for tpu_custom_call.1']
    #allocation4 [shape = 'u8[2048]{0}', space=vmem, size = 0x800, scoped, tag = 'input window, operand 1, single buffered']
    #allocation5 [shape = 's32[1]{0}', space=sflag, size = 0x4, scoped, tag = 'scoped memory for tpu_custom_call.1']
    %7 = vsyncpa [#allocation3], 0
    %8 = vsyncpa [#allocation5], 0
    // Predicated region
    $region2: #{tpu_custom_call.1} parent=1 // pred_check
      _
    $region3: #{tpu_custom_call.1} parent=1 // pred_check_branch
      %10 = sbr.rel (0) target = $region5
    $region4: #{tpu_custom_call.1} parent=1 // pred_region
      %s12 = ssub.s32 128, 128
      %13 = vsyncadd [#allocation3], %s12
      %s15 = sshll.u32 [#allocation2], 4
      %s16 = int_to_ptr.vmem [resolvable:$true] %s15
      %18 = dma.hbm_to_vmem [thread:$0]  %s0, 128, %s16, [#allocation3]
    $region5: #{tpu_custom_call.1} parent=1 // pred_fallthru
      _
    // Predicated region
    $region6: #{tpu_custom_call.1} parent=1 // pred_check
      _
    $region7: #{tpu_custom_call.1} parent=1 // pred_check_branch
      %20 = sbr.rel (0) target = $region9
    $region8: #{tpu_custom_call.1} parent=1 // pred_region
      %s22 = ssub.s32 64, 64
      %23 = vsyncadd [#allocation5], %s22
      %s25 = sshll.u32 [#allocation4], 4
      %s26 = int_to_ptr.vmem [resolvable:$true] %s25
      %28 = dma.hbm_to_vmem [thread:$0]  %s1, 64, %s26, [#allocation5]
    $region9: #{tpu_custom_call.1} parent=1 // pred_fallthru
      _
    // Predicated region
    $region10: #{tpu_custom_call.1} parent=1 // pred_check
      _
    $region11: #{tpu_custom_call.1} parent=1 // pred_check_branch
      %30 = sbr.rel (0) target = $region13
    $region12: #{tpu_custom_call.1} parent=1 // pred_region
      %31 = dma.done [#allocation3], 128
    $region13: #{tpu_custom_call.1} parent=1 // pred_fallthru
      _
    // Predicated region
    $region14: #{tpu_custom_call.1} parent=1 // pred_check
      _
    $region15: #{tpu_custom_call.1} parent=1 // pred_check_branch
      %33 = sbr.rel (0) target = $region17
    $region16: #{tpu_custom_call.1} parent=1 // pred_region
      %34 = dma.done [#allocation5], 64
    $region17: #{tpu_custom_call.1} parent=1 // pred_fallthru
      _
    %v35 = vld [vmem:[#allocation2] sm:$0xff]
    %v36 = vld [vmem:[#allocation4] sm:$0x1]
    %v37 = vld [vmem:[#allocation4 + $0x1] sm:$0x1]
    %v38 = vld [vmem:[#allocation4 + $0x2] sm:$0x1]
    %v39 = vld [vmem:[#allocation4 + $0x3] sm:$0x1]
    %v40 = vlaneseq
    %v41 = vshrl.u32 %v40, 7
    %v42 = vsub.s32 0, %v41
    %v43 = vrot.slane %v36, %v42
    %v44 = vmul.f32 %v35, %v43
    %v45 = vlaneseq
    %v46 = vshrl.u32 %v45, 7
    %v47 = vsub.s32 0, %v46
    %v48 = vrot.slane %v38, %v47
    %v49 = vmax.f32 %v44, %v48
    %v50 = vlaneseq
    %v51 = vshrl.u32 %v50, 7
    %v52 = vsub.s32 0, %v51
    %v53 = vrot.slane %v39, %v52
    %v54 = vmin.f32 %v49, %v53
    %v55 = vlaneseq
    %v56 = vshrl.u32 %v55, 7
    %v57 = vsub.s32 0, %v56
    %v58 = vrot.slane %v37, %v57
    %v59 = vmul.f32 %v58, %v54
    %v60 = vsub.f32 %v59, %v35
    %v61 = vmul.f32 %v54, %v60
    %62 = vadd.xlane.f32.xlu0 %v61
    %v63 = vpop.xlane.xlu0 %62
    %vm64 = vcmask 7168
    %65 = vst.msk [vmem:[%s2] sm:$0xff] %vm64, %v63
    // Predicated region
    $region18: #{tpu_custom_call.1} parent=1 // pred_check
      _
    $region19: #{tpu_custom_call.1} parent=1 // pred_check_branch
      %67 = sbr.rel (0) target = $region21
    $region20: #{tpu_custom_call.1} parent=1 // pred_region
      _
    $region21: #{tpu_custom_call.1} parent=1 // pred_fallthru
      _
    // Predicated region
    $region22: #{tpu_custom_call.1} parent=1 // pred_check
      _
    $region23: #{tpu_custom_call.1} parent=1 // pred_check_branch
      %69 = sbr.rel (0) target = $region25
    $region24: #{tpu_custom_call.1} parent=1 // pred_region
      _
    $region25: #{tpu_custom_call.1} parent=1 // pred_fallthru
      _
    %70 = vsyncpa [#allocation3], 1
    %71 = vsyncpa [#allocation5], 1

</llo_original>
